<compile_context>
chip_gen: v6e
topology: v6e:2x2x1
jax: 0.10.0
libtpu: 0.0.40
codegen_flags: <defaults>
</compile_context>

<pallas_src>
import functools

import jax
import jax.numpy as jnp
from jax.experimental import pallas as pl
from jax.experimental.pallas import tpu as pltpu


def _fused_convnet_kernel(x_ref, *refs, layer_cfgs):
    """One grid step: Nb samples through every conv+BN+ReLU layer.

    Positional refs after x_ref:
      w_i:   (K_i, Cin_i, Cout_i)     bf16, BN scale folded in
      s_i:   (1, Cout_i)              f32, b*scale + beta - mean*scale
      ... one (w_i, s_i) pair per layer ...
      o_ref: (Nb, T, Cout_last)       f32 output block
      pad_i: (Nb, T + pad_i, Cin_i)   bf16 VMEM scratch (causal left-pad buffer)
    """
    n_layers = len(layer_cfgs)
    w_refs = refs[0:2 * n_layers:2]
    s_refs = refs[1:2 * n_layers:2]
    o_ref = refs[2 * n_layers]
    pad_refs = refs[2 * n_layers + 1:]

    nb, T, _ = x_ref.shape

    # Zero the causal-pad prefix rows once; they are never overwritten after.
    @pl.when(pl.program_id(0) == 0)
    def _init_pads():
        for i, (ksz, dil) in enumerate(layer_cfgs):
            pad = (ksz - 1) * dil
            if pad:
                pr = pad_refs[i]
                pr[:, 0:pad, :] = jnp.zeros((nb, pad, pr.shape[2]), pr.dtype)

    h = x_ref[...]                                      # (Nb, T, Cin0) bf16
    for i, (ksz, dil) in enumerate(layer_cfgs):
        pad = (ksz - 1) * dil
        w_ref = w_refs[i]
        cin, cout = w_ref.shape[1], w_ref.shape[2]
        xp = pad_refs[i]
        xp[:, pl.ds(pad, T), :] = h                     # place after zero prefix

        # Causal dilated conv = sum of K shifted matmuls; M = Nb*T on the MXU,
        # f32 accumulation. T is a multiple of 8 so the reshape is a free
        # retiling (no data movement).
        acc = jnp.zeros((nb * T, cout), jnp.float32)
        for k in range(ksz):
            xk = xp[:, pl.ds(k * dil, T), :].reshape(nb * T, cin)
            acc = acc + jnp.dot(xk, w_ref[k], preferred_element_type=jnp.float32)

        # Folded bias/BatchNorm + ReLU epilogue (single add + max).
        acc = jnp.maximum(acc + s_refs[i][...], 0.0)
        if i + 1 < n_layers:
            # Intermediate activation stays in vregs/VMEM, never touches HBM.
            h = acc.astype(jnp.bfloat16).reshape(nb, T, cout)
        else:
            o_ref[...] = acc.reshape(nb, T, cout).astype(o_ref.dtype)
    # TODO(synk): for production-size T*Cout, move `acc` into a VMEM scratch
    # and tile T so the live f32 accumulator stays within the vreg file.


def _fold_layer(p, eps):
    """Fold conv bias + eval-mode BatchNorm into (bf16 weights, f32 shift)."""
    scale = p["gamma"] / jnp.sqrt(p["var"] + eps)                   # (Cout,)
    w = (p["w"] * scale[None, None, :]).astype(jnp.bfloat16)        # (K, Cin, Cout)
    shift = p["b"] * scale + p["beta"] - p["mean"] * scale          # (Cout,)
    return w, shift.reshape(1, -1).astype(jnp.float32)


def _pick_block_n(n, target=8):
    """Largest divisor of n that is <= target while keeping a grid of >= 2
    steps (when n > 1), so the parallel sample axis shards across v7x's two
    TensorCores instead of collapsing to a single grid step."""
    nb = min(target, max(1, n // 2))
    while n % nb:
        nb -= 1
    return nb


def convnet_forward(x, params, *, dilation=2, eps=1e-5, block_n=None):
    """x: (B, n_node, T, in_dim) -> (B, n_node, T, num_channels[-1]).

    Single fused pallas_call for the whole ConvNet (eval-mode BatchNorm).
    """
    B, n_node, T, in_dim = x.shape
    N = B * n_node
    # torch does permute(0,1,3,2).view(-1, in_dim, T) to get NCT; our kernel is
    # NTC, so the flatten is a plain reshape and the final permute is a no-op.
    h = x.reshape(N, T, in_dim).astype(jnp.bfloat16)

    # TODO(synk): BatchNorm1d is reproduced in eval mode only (running stats
    # folded into the weights); training-mode batch statistics are not computed.
    folded = [_fold_layer(p, eps) for p in params]
    layer_cfgs = tuple(
        (int(w.shape[0]), dilation ** i) for i, (w, _) in enumerate(folded))

    nb = block_n if block_n is not None else _pick_block_n(N)
    assert N % nb == 0, (N, nb)

    in_specs = [pl.BlockSpec((nb, T, in_dim), lambda n: (n, 0, 0))]
    flat_params = []
    scratch_shapes = []
    for (w, _s), (ksz, dil) in zip(folded, layer_cfgs):
        _k, cin, cout = w.shape
        in_specs.append(pl.BlockSpec((_k, cin, cout), lambda n: (0, 0, 0)))
        in_specs.append(pl.BlockSpec((1, cout), lambda n: (0, 0)))
        flat_params += [w, _s]
        scratch_shapes.append(
            pltpu.VMEM((nb, T + (ksz - 1) * dil, cin), jnp.bfloat16))
    cout_last = folded[-1][0].shape[2]

    kernel = functools.partial(_fused_convnet_kernel, layer_cfgs=layer_cfgs)
    # TODO(synk): Cout=8 at these toy sizes keeps output stores masked
    # (vst.msk); production channel counts should be >=128 for lane-dense
    # stores -- padding 8->128 here would inflate HBM writeback 16x on a
    # memory-bound net, so it is intentionally not done.
    out = pl.pallas_call(
        kernel,
        out_shape=jax.ShapeDtypeStruct((N, T, cout_last), jnp.float32),
        grid_spec=pltpu.PrefetchScalarGridSpec(
            num_scalar_prefetch=0,
            grid=(N // nb,),
            in_specs=in_specs,
            out_specs=pl.BlockSpec((nb, T, cout_last), lambda n: (n, 0, 0)),
            scratch_shapes=scratch_shapes),
        compiler_params=pltpu.CompilerParams(
            dimension_semantics=("parallel",)),
    )(h, *flat_params)
    return out.reshape(B, n_node, T, cout_last)


def init_convnet_params(key, num_inputs, num_channels, kernel_sizes):
    """Deterministic synthetic parameters matching the torch module's shapes."""
    params = []
    for i, (cout, ksz) in enumerate(zip(num_channels, kernel_sizes)):
        cin = num_inputs if i == 0 else num_channels[i - 1]
        key, k1, k2, k3, k4, k5, k6 = jax.random.split(key, 7)
        bound = 1.0 / float(cin * ksz) ** 0.5
        # stored as (K, Cin, Cout) == transpose of torch's (Cout, Cin, K)
        w = jax.random.uniform(k1, (ksz, cin, cout), jnp.float32, -bound, bound)
        b = jax.random.uniform(k2, (cout,), jnp.float32, -bound, bound)
        gamma = jax.random.uniform(k3, (cout,), jnp.float32, 0.5, 1.5)
        beta = jax.random.uniform(k4, (cout,), jnp.float32, -0.5, 0.5)
        mean = jax.random.uniform(k5, (cout,), jnp.float32, -0.2, 0.2)
        var = jax.random.uniform(k6, (cout,), jnp.float32, 0.5, 1.5)
        params.append(dict(w=w, b=b, gamma=gamma, beta=beta, mean=mean, var=var))
    return params


def convnet_reference(x, params, *, dilation=2, eps=1e-5):
    """Pure-JAX reference with identical numerics (bf16 operands, f32 accum)."""
    B, n_node, T, in_dim = x.shape
    h = x.reshape(B * n_node, T, in_dim).astype(jnp.bfloat16).astype(jnp.float32)
    n_layers = len(params)
    for i, p in enumerate(params):
        w, shift = _fold_layer(p, eps)
        w = w.astype(jnp.float32)
        ksz = w.shape[0]
        dil = dilation ** i
        pad = (ksz - 1) * dil
        hp = jnp.pad(h, ((0, 0), (pad, 0), (0, 0)))
        acc = jnp.zeros((h.shape[0], T, w.shape[2]), jnp.float32)
        for k in range(ksz):
            acc = acc + jnp.einsum(
                "ntc,cd->ntd", hp[:, k * dil:k * dil + T, :], w[k])
        h = jnp.maximum(acc + shift[None, :, :], 0.0)
        if i + 1 < n_layers:
            h = h.astype(jnp.bfloat16).astype(jnp.float32)
    return h.reshape(B, n_node, T, -1)


if __name__ == "__main__":
    key = jax.random.PRNGKey(0)
    kx, kp = jax.random.split(key)

    # Small shapes consistent with ConvNet's forward: (batch, n_node, T, in_dim)
    B, n_node, T, in_dim = 2, 4, 16, 4
    num_channels = [8, 8]
    kernel_sizes = [3, 3]
    dilation = 2

    x = jax.random.normal(kx, (B, n_node, T, in_dim), jnp.float32)
    params = init_convnet_params(kp, in_dim, num_channels, kernel_sizes)

    out = convnet_forward(x, params, dilation=dilation)
    jax.block_until_ready(out)
    assert out.shape == (B, n_node, T, num_channels[-1]), out.shape
    assert bool(jnp.all(jnp.isfinite(out)))

    ref = convnet_reference(x, params, dilation=dilation)
    max_err = float(jnp.max(jnp.abs(out - ref)))
    assert bool(jnp.allclose(out, ref, atol=2e-2, rtol=2e-2)), max_err
    print("KERNEL_OK")
</pallas_src>

<mosaic_0001>
module attributes {stable_mosaic.version = 11 : i64} {
  func.func @_fused_convnet_kernel(%arg0: i32, %arg1: memref<4x16x4xbf16, #tpu.memory_space<vmem>>, %arg2: memref<3x4x8xbf16, #tpu.memory_space<vmem>>, %arg3: memref<1x8xf32, #tpu.memory_space<vmem>>, %arg4: memref<3x8x8xbf16, #tpu.memory_space<vmem>>, %arg5: memref<1x8xf32, #tpu.memory_space<vmem>>, %arg6: memref<4x16x8xf32, #tpu.memory_space<vmem>>, %arg7: memref<4x18x4xbf16, #tpu.memory_space<vmem>>, %arg8: memref<4x20x8xbf16, #tpu.memory_space<vmem>>) attributes {dimension_semantics = [#tpu.dimension_semantics<parallel>], iteration_bounds = array<i64: 2>, scalar_prefetch = 0 : i64, scratch_operands = 2 : i64, tpu.core_type = #tpu.core_type<tc>, window_params = [{transform_indices = @transform_0, window_bounds = array<i64: 4, 16, 4>}, {pipeline_mode = #tpu.pipeline_mode<synchronous>, transform_indices = @transform_1, window_bounds = array<i64: 3, 4, 8>}, {pipeline_mode = #tpu.pipeline_mode<synchronous>, transform_indices = @transform_2, window_bounds = array<i64: 1, 8>}, {pipeline_mode = #tpu.pipeline_mode<synchronous>, transform_indices = @transform_3, window_bounds = array<i64: 3, 8, 8>}, {pipeline_mode = #tpu.pipeline_mode<synchronous>, transform_indices = @transform_4, window_bounds = array<i64: 1, 8>}, {transform_indices = @transform_5, window_bounds = array<i64: 4, 16, 8>}]} {
    %c0_i32 = arith.constant 0 : i32
    %0 = arith.cmpi eq, %arg0, %c0_i32 : i32
    %1 = arith.extui %0 : i1 to i32
    %c0_i32_0 = arith.constant 0 : i32
    %2 = arith.cmpi ne, %1, %c0_i32_0 : i32
    scf.if %2 {
      %cst_58 = arith.constant 0.000000e+00 : bf16
      %58 = vector.broadcast %cst_58 : bf16 to vector<4x2x4xbf16>
      %c0_59 = arith.constant 0 : index
      %c0_60 = arith.constant 0 : index
      %c0_61 = arith.constant 0 : index
      %59 = vector.load %arg7[%c0_59, %c0_60, %c0_61] : memref<4x18x4xbf16, #tpu.memory_space<vmem>>, vector<4x2x4xbf16>
      tpu.vector_store %arg7[%c0_59, %c0_60, %c0_61], %58 {strides = array<i32>} : memref<4x18x4xbf16, #tpu.memory_space<vmem>>, vector<4x2x4xbf16>,
      %cst_62 = arith.constant 0.000000e+00 : bf16
      %60 = vector.broadcast %cst_62 : bf16 to vector<4x4x8xbf16>
      %c0_63 = arith.constant 0 : index
      %c0_64 = arith.constant 0 : index
      %c0_65 = arith.constant 0 : index
      %61 = vector.load %arg8[%c0_63, %c0_64, %c0_65] : memref<4x20x8xbf16, #tpu.memory_space<vmem>>, vector<4x4x8xbf16>
      tpu.vector_store %arg8[%c0_63, %c0_64, %c0_65], %60 {strides = array<i32>} : memref<4x20x8xbf16, #tpu.memory_space<vmem>>, vector<4x4x8xbf16>,
    } else {
    }
    %c0 = arith.constant 0 : index
    %c0_1 = arith.constant 0 : index
    %c0_2 = arith.constant 0 : index
    %3 = vector.load %arg1[%c0, %c0_1, %c0_2] : memref<4x16x4xbf16, #tpu.memory_space<vmem>>, vector<4x16x4xbf16>
    %c0_3 = arith.constant 0 : index
    %c2 = arith.constant 2 : index
    %c0_4 = arith.constant 0 : index
    %4 = vector.load %arg7[%c0_3, %c2, %c0_4] : memref<4x18x4xbf16, #tpu.memory_space<vmem>>, vector<4x16x4xbf16>
    tpu.vector_store %arg7[%c0_3, %c2, %c0_4], %3 {strides = array<i32>} : memref<4x18x4xbf16, #tpu.memory_space<vmem>>, vector<4x16x4xbf16>,
    %cst = arith.constant 0.000000e+00 : f32
    %5 = vector.broadcast %cst : f32 to vector<64x8xf32>
    %c0_5 = arith.constant 0 : index
    %c0_6 = arith.constant 0 : index
    %c0_7 = arith.constant 0 : index
    %6 = vector.load %arg7[%c0_5, %c0_6, %c0_7] : memref<4x18x4xbf16, #tpu.memory_space<vmem>>, vector<4x16x4xbf16>
    %7 = vector.shape_cast %6 : vector<4x16x4xbf16> to vector<64x4xbf16>
    %c0_8 = arith.constant 0 : index
    %c0_9 = arith.constant 0 : index
    %c0_10 = arith.constant 0 : index
    %8 = vector.load %arg2[%c0_8, %c0_9, %c0_10] : memref<3x4x8xbf16, #tpu.memory_space<vmem>>, vector<1x4x8xbf16>
    %9 = vector.shape_cast %8 : vector<1x4x8xbf16> to vector<4x8xbf16>
    %cst_11 = arith.constant dense<0.000000e+00> : vector<64x8xf32>
    %10 = tpu.matmul %7, %9, %cst_11 {dimension_numbers = #tpu.dot_dimension_numbers<[1], [0], [0], [1], [0, 0, 1, 1], [], []>} : vector<64x4xbf16>, vector<4x8xbf16>, vector<64x8xf32> -> vector<64x8xf32>
    %11 = arith.addf %5, %10 : vector<64x8xf32>
    %c0_12 = arith.constant 0 : index
    %c1 = arith.constant 1 : index
    %c0_13 = arith.constant 0 : index
    %12 = vector.load %arg7[%c0_12, %c1, %c0_13] : memref<4x18x4xbf16, #tpu.memory_space<vmem>>, vector<4x16x4xbf16>
    %13 = vector.shape_cast %12 : vector<4x16x4xbf16> to vector<64x4xbf16>
    %c1_14 = arith.constant 1 : index
    %c0_15 = arith.constant 0 : index
    %c0_16 = arith.constant 0 : index
    %14 = vector.load %arg2[%c1_14, %c0_15, %c0_16] : memref<3x4x8xbf16, #tpu.memory_space<vmem>>, vector<1x4x8xbf16>
    %15 = vector.shape_cast %14 : vector<1x4x8xbf16> to vector<4x8xbf16>
    %cst_17 = arith.constant dense<0.000000e+00> : vector<64x8xf32>
    %16 = tpu.matmul %13, %15, %cst_17 {dimension_numbers = #tpu.dot_dimension_numbers<[1], [0], [0], [1], [0, 0, 1, 1], [], []>} : vector<64x4xbf16>, vector<4x8xbf16>, vector<64x8xf32> -> vector<64x8xf32>
    %17 = arith.addf %11, %16 : vector<64x8xf32>
    %c0_18 = arith.constant 0 : index
    %c2_19 = arith.constant 2 : index
    %c0_20 = arith.constant 0 : index
    %18 = vector.load %arg7[%c0_18, %c2_19, %c0_20] : memref<4x18x4xbf16, #tpu.memory_space<vmem>>, vector<4x16x4xbf16>
    %19 = vector.shape_cast %18 : vector<4x16x4xbf16> to vector<64x4xbf16>
    %c2_21 = arith.constant 2 : index
    %c0_22 = arith.constant 0 : index
    %c0_23 = arith.constant 0 : index
    %20 = vector.load %arg2[%c2_21, %c0_22, %c0_23] : memref<3x4x8xbf16, #tpu.memory_space<vmem>>, vector<1x4x8xbf16>
    %21 = vector.shape_cast %20 : vector<1x4x8xbf16> to vector<4x8xbf16>
    %cst_24 = arith.constant dense<0.000000e+00> : vector<64x8xf32>
    %22 = tpu.matmul %19, %21, %cst_24 {dimension_numbers = #tpu.dot_dimension_numbers<[1], [0], [0], [1], [0, 0, 1, 1], [], []>} : vector<64x4xbf16>, vector<4x8xbf16>, vector<64x8xf32> -> vector<64x8xf32>
    %23 = arith.addf %17, %22 : vector<64x8xf32>
    %c0_25 = arith.constant 0 : index
    %c0_26 = arith.constant 0 : index
    %24 = vector.load %arg3[%c0_25, %c0_26] : memref<1x8xf32, #tpu.memory_space<vmem>>, vector<1x8xf32>
    %25 = vector.broadcast %24 : vector<1x8xf32> to vector<64x8xf32>
    %26 = arith.addf %23, %25 : vector<64x8xf32>
    %cst_27 = arith.constant 0.000000e+00 : f32
    %27 = vector.broadcast %cst_27 : f32 to vector<64x8xf32>
    %28 = arith.maximumf %26, %27 : vector<64x8xf32>
    %29 = arith.truncf %28 : vector<64x8xf32> to vector<64x8xbf16>
    %30 = vector.shape_cast %29 : vector<64x8xbf16> to vector<4x16x8xbf16>
    %c0_28 = arith.constant 0 : index
    %c4 = arith.constant 4 : index
    %c0_29 = arith.constant 0 : index
    %31 = vector.load %arg8[%c0_28, %c4, %c0_29] : memref<4x20x8xbf16, #tpu.memory_space<vmem>>, vector<4x16x8xbf16>
    tpu.vector_store %arg8[%c0_28, %c4, %c0_29], %30 {strides = array<i32>} : memref<4x20x8xbf16, #tpu.memory_space<vmem>>, vector<4x16x8xbf16>,
    %cst_30 = arith.constant 0.000000e+00 : f32
    %32 = vector.broadcast %cst_30 : f32 to vector<64x8xf32>
    %c0_31 = arith.constant 0 : index
    %c0_32 = arith.constant 0 : index
    %c0_33 = arith.constant 0 : index
    %33 = vector.load %arg8[%c0_31, %c0_32, %c0_33] : memref<4x20x8xbf16, #tpu.memory_space<vmem>>, vector<4x16x8xbf16>
    %34 = vector.shape_cast %33 : vector<4x16x8xbf16> to vector<64x8xbf16>
    %c0_34 = arith.constant 0 : index
    %c0_35 = arith.constant 0 : index
    %c0_36 = arith.constant 0 : index
    %35 = vector.load %arg4[%c0_34, %c0_35, %c0_36] : memref<3x8x8xbf16, #tpu.memory_space<vmem>>, vector<1x8x8xbf16>
    %36 = vector.shape_cast %35 : vector<1x8x8xbf16> to vector<8x8xbf16>
    %cst_37 = arith.constant dense<0.000000e+00> : vector<64x8xf32>
    %37 = tpu.matmul %34, %36, %cst_37 {dimension_numbers = #tpu.dot_dimension_numbers<[1], [0], [0], [1], [0, 0, 1, 1], [], []>} : vector<64x8xbf16>, vector<8x8xbf16>, vector<64x8xf32> -> vector<64x8xf32>
    %38 = arith.addf %32, %37 : vector<64x8xf32>
    %c0_38 = arith.constant 0 : index
    %c2_39 = arith.constant 2 : index
    %c0_40 = arith.constant 0 : index
    %39 = vector.load %arg8[%c0_38, %c2_39, %c0_40] : memref<4x20x8xbf16, #tpu.memory_space<vmem>>, vector<4x16x8xbf16>
    %40 = vector.shape_cast %39 : vector<4x16x8xbf16> to vector<64x8xbf16>
    %c1_41 = arith.constant 1 : index
    %c0_42 = arith.constant 0 : index
    %c0_43 = arith.constant 0 : index
    %41 = vector.load %arg4[%c1_41, %c0_42, %c0_43] : memref<3x8x8xbf16, #tpu.memory_space<vmem>>, vector<1x8x8xbf16>
    %42 = vector.shape_cast %41 : vector<1x8x8xbf16> to vector<8x8xbf16>
    %cst_44 = arith.constant dense<0.000000e+00> : vector<64x8xf32>
    %43 = tpu.matmul %40, %42, %cst_44 {dimension_numbers = #tpu.dot_dimension_numbers<[1], [0], [0], [1], [0, 0, 1, 1], [], []>} : vector<64x8xbf16>, vector<8x8xbf16>, vector<64x8xf32> -> vector<64x8xf32>
    %44 = arith.addf %38, %43 : vector<64x8xf32>
    %c0_45 = arith.constant 0 : index
    %c4_46 = arith.constant 4 : index
    %c0_47 = arith.constant 0 : index
    %45 = vector.load %arg8[%c0_45, %c4_46, %c0_47] : memref<4x20x8xbf16, #tpu.memory_space<vmem>>, vector<4x16x8xbf16>
    %46 = vector.shape_cast %45 : vector<4x16x8xbf16> to vector<64x8xbf16>
    %c2_48 = arith.constant 2 : index
    %c0_49 = arith.constant 0 : index
    %c0_50 = arith.constant 0 : index
    %47 = vector.load %arg4[%c2_48, %c0_49, %c0_50] : memref<3x8x8xbf16, #tpu.memory_space<vmem>>, vector<1x8x8xbf16>
    %48 = vector.shape_cast %47 : vector<1x8x8xbf16> to vector<8x8xbf16>
    %cst_51 = arith.constant dense<0.000000e+00> : vector<64x8xf32>
    %49 = tpu.matmul %46, %48, %cst_51 {dimension_numbers = #tpu.dot_dimension_numbers<[1], [0], [0], [1], [0, 0, 1, 1], [], []>} : vector<64x8xbf16>, vector<8x8xbf16>, vector<64x8xf32> -> vector<64x8xf32>
    %50 = arith.addf %44, %49 : vector<64x8xf32>
    %c0_52 = arith.constant 0 : index
    %c0_53 = arith.constant 0 : index
    %51 = vector.load %arg5[%c0_52, %c0_53] : memref<1x8xf32, #tpu.memory_space<vmem>>, vector<1x8xf32>
    %52 = vector.broadcast %51 : vector<1x8xf32> to vector<64x8xf32>
    %53 = arith.addf %50, %52 : vector<64x8xf32>
    %cst_54 = arith.constant 0.000000e+00 : f32
    %54 = vector.broadcast %cst_54 : f32 to vector<64x8xf32>
    %55 = arith.maximumf %53, %54 : vector<64x8xf32>
    %56 = vector.shape_cast %55 : vector<64x8xf32> to vector<4x16x8xf32>
    %c0_55 = arith.constant 0 : index
    %c0_56 = arith.constant 0 : index
    %c0_57 = arith.constant 0 : index
    %57 = vector.load %arg6[%c0_55, %c0_56, %c0_57] : memref<4x16x8xf32, #tpu.memory_space<vmem>>, vector<4x16x8xf32>
    tpu.vector_store %arg6[%c0_55, %c0_56, %c0_57], %56 {strides = array<i32>} : memref<4x16x8xf32, #tpu.memory_space<vmem>>, vector<4x16x8xf32>,
    return
  }
  func.func @transform_0(%arg0: i32) -> (i32, i32, i32) {
    %c0_i32 = arith.constant 0 : i32
    %c0_i32_0 = arith.constant 0 : i32
    %c0_i32_1 = arith.constant 0 : i32
    return %arg0, %c0_i32, %c0_i32_0 : i32, i32, i32
  }
  func.func @transform_1(%arg0: i32) -> (i32, i32, i32) {
    %c0_i32 = arith.constant 0 : i32
    %c0_i32_0 = arith.constant 0 : i32
    %c0_i32_1 = arith.constant 0 : i32
    %c0_i32_2 = arith.constant 0 : i32
    return %c0_i32, %c0_i32_0, %c0_i32_1 : i32, i32, i32
  }
  func.func @transform_2(%arg0: i32) -> (i32, i32) {
    %c0_i32 = arith.constant 0 : i32
    %c0_i32_0 = arith.constant 0 : i32
    %c0_i32_1 = arith.constant 0 : i32
    return %c0_i32, %c0_i32_0 : i32, i32
  }
  func.func @transform_3(%arg0: i32) -> (i32, i32, i32) {
    %c0_i32 = arith.constant 0 : i32
    %c0_i32_0 = arith.constant 0 : i32
    %c0_i32_1 = arith.constant 0 : i32
    %c0_i32_2 = arith.constant 0 : i32
    return %c0_i32, %c0_i32_0, %c0_i32_1 : i32, i32, i32
  }
  func.func @transform_4(%arg0: i32) -> (i32, i32) {
    %c0_i32 = arith.constant 0 : i32
    %c0_i32_0 = arith.constant 0 : i32
    %c0_i32_1 = arith.constant 0 : i32
    return %c0_i32, %c0_i32_0 : i32, i32
  }
  func.func @transform_5(%arg0: i32) -> (i32, i32, i32) {
    %c0_i32 = arith.constant 0 : i32
    %c0_i32_0 = arith.constant 0 : i32
    %c0_i32_1 = arith.constant 0 : i32
    return %arg0, %c0_i32, %c0_i32_0 : i32, i32, i32
  }
}

</mosaic_0001>

<llo_original>
// kernel: tpu_custom_call.1
$region0: #{tpu_custom_call.1}
  #allocation0 [shape = 'u32[]', space=smem, size = 0x4, offset = 0x4, fixed_abs, tag = 'smem constant byte address 0x4 - core index']
  #allocation1 [shape = 'u32[144,128]{1,0:T(1,128)}', space=vmem, size = 0x12000, scoped, tag = 'internal scratch']
  #allocation2 [shape = 'bf16[4,18,4]{2,1,0:T(8,128)(2,1)}', space=vmem, size = 0x6000, scoped, tag = 'scratch operand']
  #allocation3 [shape = 'bf16[4,20,8]{2,1,0:T(8,128)(2,1)}', space=vmem, size = 0x6000, scoped, tag = 'scratch operand']
  %s0 = inlined_call_operand.vmem [shape: bf16[8,16,4], index: 0, kind: input, shape index: {}]
  %s1 = inlined_call_operand.vmem [shape: bf16[3,4,8], index: 1, kind: input, shape index: {}]
  %s2 = inlined_call_operand.vmem [shape: f32[1,8], index: 2, kind: input, shape index: {}]
  %s3 = inlined_call_operand.vmem [shape: bf16[3,8,8], index: 3, kind: input, shape index: {}]
  %s4 = inlined_call_operand.vmem [shape: f32[1,8], index: 4, kind: input, shape index: {}]
  %s5 = inlined_call_operand.vmem [shape: f32[8,16,8], index: 5, kind: output, shape index: {}]
  %s6 = sld [smem:[#allocation0]]
  $region57: #{tpu_custom_call.1} parent=0
    _
  %s8 = ssub.s32 1, %s6
  %s9 = scalar_select 0, %s8, %s6
  loop: start=0, step=1, limit=4
  $region2: #{tpu_custom_call.1} parent=0 // loop_pre_header
    _
  $region3: #{tpu_custom_call.1} parent=0 // loop_header
    %s11 = sphi 0, %s15
    %p12 = scmp.ge.s32.totalorder %s11, 4
    %s21 = sphi 0, %s23
    %s24 = sphi 0, %s21
    %s25 = sphi 0, %s24
    %s41 = sphi 0, %s25
    %s45 = sphi 0, %s45
    %s47 = sphi 0, %s45
    %s48 = sphi 0, %s47
    %s62 = sphi 0, %s48
    %s66 = sphi 0, %s66
    %s68 = sphi 0, %s66
    %s69 = sphi 0, %s68
    %s83 = sphi 0, %s69
    %s87 = sphi 0, %s87
    %s89 = sphi 0, %s87
    %s90 = sphi 0, %s89
    %s104 = sphi 0, %s90
    %s108 = sphi 0, %s108
    %s110 = sphi 0, %s108
    %s111 = sphi 0, %s110
    %s125 = sphi 0, %s111
    %s131 = sphi 0, %s133
    %s134 = sphi 0, %s131
    %s135 = sphi 0, %s134
    %s151 = sphi 0, %s135
  $region4: #{tpu_custom_call.1} parent=0 // loop_header_branch
    %14 = sbr.rel (%p12) target = $region8
  $region5: #{tpu_custom_call.1} parent=0 // loop_body
    %s16 = ssub.s32 %s11, 1
    %s17 = ssub.s32 %s11, 2
    %s18 = sadd.s32 %s11, 1
    %s19 = ssub.s32 %s11, %s18
    %p20 = scmp.eq.s32.totalorder %s19, 0
    %s22 = sadd.s32 %s21, 1
    %s23 = scalar_select %p20, %s21, %s22
    %p26 = pneg %p20
    %p27 = scmp.eq.s32.totalorder %s11, 1
    %p28 = por %p26, %p27
    %p29 = scmp.ne.s32.totalorder %s21, %s24
    %p30 = scmp.eq.s32.totalorder %s11, 0
    %p31 = por %p29, %p30
    %p32 = scmp.ne.s32.totalorder %s21, %s24
    %p33 = scmp.eq.s32.totalorder %s16, 1
    %p34 = por %p32, %p33
    %p35 = scmp.ne.s32.totalorder %s24, %s25
    %p36 = scmp.eq.s32.totalorder %s16, 0
    %p37 = por %p35, %p36
    %p38 = scmp.ne.s32.totalorder %s24, %s25
    %p39 = scmp.eq.s32.totalorder %s17, 1
    %p40 = por %p38, %p39
    %p42 = scmp.ne.s32.totalorder %s25, %s41
    %p43 = scmp.eq.s32.totalorder %s17, 0
    %p44 = por %p42, %p43
    %s46 = sadd.s32 %s45, 1
    %p49 = scmp.eq.s32.totalorder %s11, 1
    %p50 = scmp.ne.s32.totalorder %s45, %s47
    %p51 = scmp.eq.s32.totalorder %s11, 0
    %p52 = por %p50, %p51
    %p53 = scmp.ne.s32.totalorder %s45, %s47
    %p54 = scmp.eq.s32.totalorder %s16, 1
    %p55 = por %p53, %p54
    %p56 = scmp.ne.s32.totalorder %s47, %s48
    %p57 = scmp.eq.s32.totalorder %s16, 0
    %p58 = por %p56, %p57
    %p59 = scmp.ne.s32.totalorder %s47, %s48
    %p60 = scmp.eq.s32.totalorder %s17, 1
    %p61 = por %p59, %p60
    %p63 = scmp.ne.s32.totalorder %s48, %s62
    %p64 = scmp.eq.s32.totalorder %s17, 0
    %p65 = por %p63, %p64
    %s67 = sadd.s32 %s66, 1
    %p70 = scmp.eq.s32.totalorder %s11, 1
    %p71 = scmp.ne.s32.totalorder %s66, %s68
    %p72 = scmp.eq.s32.totalorder %s11, 0
    %p73 = por %p71, %p72
    %p74 = scmp.ne.s32.totalorder %s66, %s68
    %p75 = scmp.eq.s32.totalorder %s16, 1
    %p76 = por %p74, %p75
    %p77 = scmp.ne.s32.totalorder %s68, %s69
    %p78 = scmp.eq.s32.totalorder %s16, 0
    %p79 = por %p77, %p78
    %p80 = scmp.ne.s32.totalorder %s68, %s69
    %p81 = scmp.eq.s32.totalorder %s17, 1
    %p82 = por %p80, %p81
    %p84 = scmp.ne.s32.totalorder %s69, %s83
    %p85 = scmp.eq.s32.totalorder %s17, 0
    %p86 = por %p84, %p85
    %s88 = sadd.s32 %s87, 1
    %p91 = scmp.eq.s32.totalorder %s11, 1
    %p92 = scmp.ne.s32.totalorder %s87, %s89
    %p93 = scmp.eq.s32.totalorder %s11, 0
    %p94 = por %p92, %p93
    %p95 = scmp.ne.s32.totalorder %s87, %s89
    %p96 = scmp.eq.s32.totalorder %s16, 1
    %p97 = por %p95, %p96
    %p98 = scmp.ne.s32.totalorder %s89, %s90
    %p99 = scmp.eq.s32.totalorder %s16, 0
    %p100 = por %p98, %p99
    %p101 = scmp.ne.s32.totalorder %s89, %s90
    %p102 = scmp.eq.s32.totalorder %s17, 1
    %p103 = por %p101, %p102
    %p105 = scmp.ne.s32.totalorder %s90, %s104
    %p106 = scmp.eq.s32.totalorder %s17, 0
    %p107 = por %p105, %p106
    %s109 = sadd.s32 %s108, 1
    %p112 = scmp.eq.s32.totalorder %s11, 1
    %p113 = scmp.ne.s32.totalorder %s108, %s110
    %p114 = scmp.eq.s32.totalorder %s11, 0
    %p115 = por %p113, %p114
    %p116 = scmp.ne.s32.totalorder %s108, %s110
    %p117 = scmp.eq.s32.totalorder %s16, 1
    %p118 = por %p116, %p117
    %p119 = scmp.ne.s32.totalorder %s110, %s111
    %p120 = scmp.eq.s32.totalorder %s16, 0
    %p121 = por %p119, %p120
    %p122 = scmp.ne.s32.totalorder %s110, %s111
    %p123 = scmp.eq.s32.totalorder %s17, 1
    %p124 = por %p122, %p123
    %p126 = scmp.ne.s32.totalorder %s111, %s125
    %p127 = scmp.eq.s32.totalorder %s17, 0
    %p128 = por %p126, %p127
    %s129 = ssub.s32 %s11, %s18
    %p130 = scmp.eq.s32.totalorder %s129, 0
    %s132 = sadd.s32 %s131, 1
    %s133 = scalar_select %p130, %s131, %s132
    %p136 = pneg %p130
    %p137 = scmp.eq.s32.totalorder %s11, 1
    %p138 = por %p136, %p137
    %p139 = scmp.ne.s32.totalorder %s131, %s134
    %p140 = scmp.eq.s32.totalorder %s11, 0
    %p141 = por %p139, %p140
    %p142 = scmp.ne.s32.totalorder %s131, %s134
    %p143 = scmp.eq.s32.totalorder %s16, 1
    %p144 = por %p142, %p143
    %p145 = scmp.ne.s32.totalorder %s134, %s135
    %p146 = scmp.eq.s32.totalorder %s16, 0
    %p147 = por %p145, %p146
    %p148 = scmp.ne.s32.totalorder %s134, %s135
    %p149 = scmp.eq.s32.totalorder %s17, 1
    %p150 = por %p148, %p149
    %p152 = scmp.ne.s32.totalorder %s135, %s151
    %p153 = scmp.eq.s32.totalorder %s17, 0
    %p154 = por %p152, %p153
    %p155 = scmp.le.s32.totalorder 1, %s11
    %p156 = scmp.lt.s32.totalorder %s11, 3
    %p157 = pnand %p155, %p156
    %p158 = pneg %p157
    // Predicated region
    $region9: #{tpu_custom_call.1} parent=5 // pred_check
      _
    $region10: #{tpu_custom_call.1} parent=5 // pred_check_branch
      %160 = sbr.rel (%p157) target = $region12
    $region11: #{tpu_custom_call.1} parent=5 // pred_region
      %s161 = ssub.s32 %s11, 1
      // Predicated region
      $region13: #{tpu_custom_call.1} parent=11 // pred_check
        %p162 = pneg %p58
      $region14: #{tpu_custom_call.1} parent=11 // pred_check_branch
        %164 = sbr.rel (%p162) target = $region16
      $region15: #{tpu_custom_call.1} parent=11 // pred_region
        _
      $region16: #{tpu_custom_call.1} parent=11 // pred_fallthru
        _
      // Predicated region
      $region17: #{tpu_custom_call.1} parent=11 // pred_check
        %p165 = pneg %p79
      $region18: #{tpu_custom_call.1} parent=11 // pred_check_branch
        %167 = sbr.rel (%p165) target = $region20
      $region19: #{tpu_custom_call.1} parent=11 // pred_region
        _
      $region20: #{tpu_custom_call.1} parent=11 // pred_fallthru
        _
      // Predicated region
      $region21: #{tpu_custom_call.1} parent=11 // pred_check
        %p168 = pneg %p100
      $region22: #{tpu_custom_call.1} parent=11 // pred_check_branch
        %170 = sbr.rel (%p168) target = $region24
      $region23: #{tpu_custom_call.1} parent=11 // pred_region
        _
      $region24: #{tpu_custom_call.1} parent=11 // pred_fallthru
        _
      // Predicated region
      $region25: #{tpu_custom_call.1} parent=11 // pred_check
        %p171 = pneg %p121
      $region26: #{tpu_custom_call.1} parent=11 // pred_check_branch
        %173 = sbr.rel (%p171) target = $region28
      $region27: #{tpu_custom_call.1} parent=11 // pred_region
        _
      $region28: #{tpu_custom_call.1} parent=11 // pred_fallthru
        _
    $region12: #{tpu_custom_call.1} parent=5 // pred_fallthru
      _
    %p174 = scmp.lt.s32.totalorder %s11, 2
    // Predicated region
    $region29: #{tpu_custom_call.1} parent=5 // pred_check
      %p175 = pneg %p174
    $region30: #{tpu_custom_call.1} parent=5 // pred_check_branch
      %177 = sbr.rel (%p175) target = $region32
    $region31: #{tpu_custom_call.1} parent=5 // pred_region
      // Predicated region
      $region33: #{tpu_custom_call.1} parent=31 // pred_check
        %p178 = pneg %p31
      $region34: #{tpu_custom_call.1} parent=31 // pred_check_branch
        %180 = sbr.rel (%p178) target = $region36
      $region35: #{tpu_custom_call.1} parent=31 // pred_region
        %s181 = smul.u32 4, %s11
        %p182 = scmp.lt.s32.totalorder %s181, 7
        %s183 = scalar_select %p182, %s181, 7
        %s184 = smul.addr %s183, 2
        %s185 = smul.addr %s184, 4
        %s186 = scalar_lea.vmem %s0, %s185
        %s187 = smul.u32 4, %s11
      $region36: #{tpu_custom_call.1} parent=31 // pred_fallthru
        _
    $region32: #{tpu_custom_call.1} parent=5 // pred_fallthru
      _
    %p188 = scmp.le.s32.totalorder 1, %s11
    %p189 = scmp.lt.s32.totalorder %s11, 3
    %p190 = pnand %p188, %p189
    %p191 = pneg %p190
    // Predicated region
    $region37: #{tpu_custom_call.1} parent=5 // pred_check
      _
    $region38: #{tpu_custom_call.1} parent=5 // pred_check_branch
      %193 = sbr.rel (%p190) target = $region40
    $region39: #{tpu_custom_call.1} parent=5 // pred_region
      %s194 = ssub.s32 %s11, 1
      %s195 = smul.u32 4, %s16
      %p196 = scmp.lt.s32.totalorder %s195, 7
      %s197 = scalar_select %p196, %s195, 7
      %s198 = smul.addr %s197, 2
      %s199 = smul.addr %s198, 4
      %s200 = scalar_lea.vmem %s0, %s199
      %p201 = pneg %p37
      %p202 = pneg %p34
      %p203 = pneg %p58
      %p204 = pneg %p55
      %p205 = pneg %p79
      %p206 = pneg %p76
      %p207 = pneg %p100
      %p208 = pneg %p97
      %p209 = pneg %p121
      %p210 = pneg %p118
      %p211 = pneg %p147
      %p212 = pneg %p144
      %s213 = smul.u32 4, %s16
      %p214 = scmp.lt.s32.totalorder %s213, 7
      %s215 = scalar_select %p214, %s213, 7
      %s216 = smul.addr %s215, 2
      %s217 = smul.addr %s216, 8
      %s218 = scalar_lea.vmem %s5, %s217
      %s219 = smul.u32 4, %s16
      %p220 = scmp.lt.s32.totalorder %s219, 7
      %s221 = scalar_select %p220, %s219, 7
      %s222 = smul.addr %s221, 2
      %s223 = smul.addr %s222, 4
      %s224 = scalar_lea.vmem %s0, %s223
      %s225 = smul.u32 4, %s16
      %s226 = smul.u32 4, %s16
      %p227 = scmp.lt.s32.totalorder %s226, 7
      %s228 = scalar_select %p227, %s226, 7
      %s229 = smul.addr %s228, 2
      %s230 = smul.addr %s229, 8
      %s231 = scalar_lea.vmem %s5, %s230
      %s232 = smul.u32 4, %s16
      %p234 = scmp.eq.s32.totalorder %s16, 0
      // Predicated region
      $region41: #{tpu_custom_call.1} parent=39 // pred_check
        %p235 = pneg %p234
      $region42: #{tpu_custom_call.1} parent=39 // pred_check_branch
        %237 = sbr.rel (%p235) target = $region44
      $region43: #{tpu_custom_call.1} parent=39 // pred_region
        %vm238 = vcmask 24576
        %239 = vst.msk [vmem:[#allocation2] sm:$0x1] %vm238, 0
        %240 = vst.msk [vmem:[#allocation2 + $0xc] sm:$0x1] %vm238, 0
        %241 = vst.msk [vmem:[#allocation2 + $0x18] sm:$0x1] %vm238, 0
        %242 = vst.msk [vmem:[#allocation2 + $0x24] sm:$0x1] %vm238, 0
        %vm243 = vcmask 58368
        %244 = vst.msk [vmem:[#allocation3] sm:$0x3] %vm243, 0
        %245 = vst.msk [vmem:[#allocation3 + $0xc] sm:$0x3] %vm243, 0
        %246 = vst.msk [vmem:[#allocation3 + $0x18] sm:$0x3] %vm243, 0
        %247 = vst.msk [vmem:[#allocation3 + $0x24] sm:$0x3] %vm243, 0
      $region44: #{tpu_custom_call.1} parent=39 // pred_fallthru
        _
      %v248 = vld [vmem:[%s224] sm:$0xf]
      %v249 = vld [vmem:[%s224 + $0x4] sm:$0xf]
      %v250 = vld [vmem:[%s224 + $0x8] sm:$0xf]
      %v251 = vld [vmem:[%s224 + $0xc] sm:$0xf]
      %v252 = vld [vmem:[%s224 + $0x10] sm:$0xf]
      %v253 = vld [vmem:[%s224 + $0x14] sm:$0xf]
      %v254 = vld [vmem:[%s224 + $0x18] sm:$0xf]
      %v255 = vld [vmem:[%s224 + $0x1c] sm:$0xf]
      %vm264 = vcmask 1040384
      %vm265 = vcmask 1044484
      %vm266 = vmor %vm264, %vm265
      %v267 = vrot.slane %v248, 7
      %v268 = vrot.slane %v267, 4
      %v269 = vrot.slane %v249, 7
      %v270 = vsel %vm266, %v268, %v269
      %v271 = vrot.slane %v269, 4
      %v272 = vrot.slane %v250, 7
      %v273 = vrot.slane %v272, 4
      %v274 = vrot.slane %v251, 7
      %v275 = vsel %vm266, %v273, %v274
      %v276 = vrot.slane %v274, 4
      %v277 = vrot.slane %v252, 7
      %v278 = vrot.slane %v277, 4
      %v279 = vrot.slane %v253, 7
      %v280 = vsel %vm266, %v278, %v279
      %v281 = vrot.slane %v279, 4
      %v282 = vrot.slane %v254, 7
      %v283 = vrot.slane %v282, 4
      %v284 = vrot.slane %v255, 7
      %v285 = vsel %vm266, %v283, %v284
      %v286 = vrot.slane %v284, 4
      %vm299 = vcmask 27649
      %300 = vst.msk [vmem:[#allocation2] sm:$0xe] %vm299, %v267
      %vm301 = vcmask 27648
      %302 = vst.msk [vmem:[#allocation2 + $0x4] sm:$0xf] %vm301, %v270
      %vm303 = vcmask 24576
      %304 = vst.msk [vmem:[#allocation2 + $0x8] sm:$0x1] %vm303, %v271
      %305 = vst.msk [vmem:[#allocation2 + $0xc] sm:$0xe] %vm299, %v272
      %306 = vst.msk [vmem:[#allocation2 + $0x10] sm:$0xf] %vm301, %v275
      %307 = vst.msk [vmem:[#allocation2 + $0x14] sm:$0x1] %vm303, %v276
      %308 = vst.msk [vmem:[#allocation2 + $0x18] sm:$0xe] %vm299, %v277
      %309 = vst.msk [vmem:[#allocation2 + $0x1c] sm:$0xf] %vm301, %v280
      %310 = vst.msk [vmem:[#allocation2 + $0x20] sm:$0x1] %vm303, %v281
      %311 = vst.msk [vmem:[#allocation2 + $0x24] sm:$0xe] %vm299, %v282
      %312 = vst.msk [vmem:[#allocation2 + $0x28] sm:$0xf] %vm301, %v285
      %313 = vst.msk [vmem:[#allocation2 + $0x2c] sm:$0x1] %vm303, %v286
      %v314 = vld [vmem:[#allocation2] sm:$0xf]
      %v315 = vld [vmem:[#allocation2 + $0x4] sm:$0xf]
      %v316 = vld [vmem:[#allocation2 + $0xc] sm:$0xf]
      %v317 = vld [vmem:[#allocation2 + $0x10] sm:$0xf]
      %v318 = vld [vmem:[#allocation2 + $0x18] sm:$0xf]
      %v319 = vld [vmem:[#allocation2 + $0x1c] sm:$0xf]
      %v320 = vld [vmem:[#allocation2 + $0x24] sm:$0xf]
      %v321 = vld [vmem:[#allocation2 + $0x28] sm:$0xf]
      %v322 = vld [vmem:[%s1] sm:$0x3]
      %v323 = vld [vmem:[#allocation2 + $0x8] sm:$0x1]
      %v324 = vld [vmem:[#allocation2 + $0x14] sm:$0x1]
      %v325 = vld [vmem:[#allocation2 + $0x20] sm:$0x1]
      %v326 = vld [vmem:[#allocation2 + $0x2c] sm:$0x1]
      %vm327 = vsmask.f32 3328
      %vm328 = vsmask.f32 7440
      %vm329 = vmor %vm327, %vm328
      %v331 = vshrl.u32 %v314, 16
      %v333 = vrot.slane %v331, 4
      %v334 = vshll.u32 %v314, 16
      %v336 = vrot.slane %v334, 5
      %v337 = vor.u32 %v333, %v336
      %v338 = vrot.slane %v337, 4
      %v340 = vshll.u32 %v315, 16
      %v342 = vrot.slane %v340, 5
      %v343 = vsel %vm329, %v338, %v342
      %v344 = vshrl.u32 %v315, 16
      %v346 = vrot.slane %v344, 4
      %v347 = vor.u32 %v346, %v342
      %v348 = vrot.slane %v347, 4
      %v350 = vshll.u32 %v323, 16
      %v352 = vrot.slane %v350, 5
      %v353 = vsel %vm329, %v348, %v352
      %v355 = vshrl.u32 %v316, 16
      %v357 = vrot.slane %v355, 4
      %v358 = vshll.u32 %v316, 16
      %v360 = vrot.slane %v358, 5
      %v361 = vor.u32 %v357, %v360
      %v362 = vrot.slane %v361, 4
      %v364 = vshll.u32 %v317, 16
      %v366 = vrot.slane %v364, 5
      %v367 = vsel %vm329, %v362, %v366
      %v368 = vshrl.u32 %v317, 16
      %v370 = vrot.slane %v368, 4
      %v371 = vor.u32 %v370, %v366
      %v372 = vrot.slane %v371, 4
      %v374 = vshll.u32 %v324, 16
      %v376 = vrot.slane %v374, 5
      %v377 = vsel %vm329, %v372, %v376
      %v379 = vshrl.u32 %v318, 16
      %v381 = vrot.slane %v379, 4
      %v382 = vshll.u32 %v318, 16
      %v384 = vrot.slane %v382, 5
      %v385 = vor.u32 %v381, %v384
      %v386 = vrot.slane %v385, 4
      %v388 = vshll.u32 %v319, 16
      %v390 = vrot.slane %v388, 5
      %v391 = vsel %vm329, %v386, %v390
      %v392 = vshrl.u32 %v319, 16
      %v394 = vrot.slane %v392, 4
      %v395 = vor.u32 %v394, %v390
      %v396 = vrot.slane %v395, 4
      %v398 = vshll.u32 %v325, 16
      %v400 = vrot.slane %v398, 5
      %v401 = vsel %vm329, %v396, %v400
      %v403 = vshrl.u32 %v320, 16
      %v405 = vrot.slane %v403, 4
      %v406 = vshll.u32 %v320, 16
      %v408 = vrot.slane %v406, 5
      %v409 = vor.u32 %v405, %v408
      %v410 = vrot.slane %v409, 4
      %v412 = vshll.u32 %v321, 16
      %v414 = vrot.slane %v412, 5
      %v415 = vsel %vm329, %v410, %v414
      %v416 = vshrl.u32 %v321, 16
      %v418 = vrot.slane %v416, 4
      %v419 = vor.u32 %v418, %v414
      %v420 = vrot.slane %v419, 4
      %v422 = vshll.u32 %v326, 16
      %v424 = vrot.slane %v422, 5
      %v425 = vsel %vm329, %v420, %v424
      %s426 = scalar_lea.vmem %s1, 2
      %v427 = vld [vmem:[%s426] sm:$0x3]
      %v428 = vunpack.c.l.b16 %v343
      %v429 = vunpack.c.l.b16 %v353
      %v430 = vunpack.c.l.b16 %v367
      %v431 = vunpack.c.l.b16 %v377
      %v432 = vunpack.c.l.b16 %v391
      %v433 = vunpack.c.l.b16 %v401
      %v434 = vunpack.c.l.b16 %v415
      %v435 = vunpack.c.l.b16 %v425
      %v436 = vpack.c.b16 %v429, %v428
      %v437 = vpack.c.b16 %v431, %v430
      %v438 = vpack.c.b16 %v433, %v432
      %v439 = vpack.c.b16 %v435, %v434
      %vm440 = vcmask 31744
      %v442 = vsel %vm440, %v436, 0
      %v445 = vsel %vm440, %v437, 0
      %v448 = vsel %vm440, %v438, 0
      %v451 = vsel %vm440, %v439, 0
      %vm453 = vcmask 1041408
      %v455 = vsel %vm453, %v427, 0
      %457 = vmatprep.subr.bf16.mxu0 0
      %458 = vmatpush1.bf16.msra.mxu0 0
      %459 = vmatprep.subr.bf16.mxu0 0
      %460 = vmatpush1.bf16.msra.mxu0 0
      %461 = vmatprep.subr.bf16.mxu0 0
      %462 = vmatpush1.bf16.msra.mxu0 0
      %463 = vmatprep.subr.bf16.mxu0 0
      %464 = vmatpush1.bf16.msra.mxu0 0
      %465 = vmatprep.subr.bf16.mxu0 0
      %466 = vmatpush1.bf16.msra.mxu0 0
      %467 = vmatprep.subr.bf16.mxu0 0
      %468 = vmatpush1.bf16.msra.mxu0 0
      %469 = vmatprep.subr.bf16.mxu0 0
      %470 = vmatpush1.bf16.msra.mxu0 0
      %471 = vmatprep.subr.bf16.mxu0 0
      %472 = vmatpush1.bf16.msra.mxu0 %v455
      %473 = vmatprep.subr.bf16.mxu0 0
      %474 = vmatpush2.bf16.msra.mxu0 0
      %475 = vmatprep.subr.bf16.mxu0 0
      %476 = vmatpush2.bf16.msra.mxu0 0
      %477 = vmatprep.subr.bf16.mxu0 0
      %478 = vmatpush2.bf16.msra.mxu0 0
      %479 = vmatprep.subr.bf16.mxu0 0
      %480 = vmatpush2.bf16.msra.mxu0 0
      %481 = vmatprep.subr.bf16.mxu0 0
      %482 = vmatpush2.bf16.msra.mxu0 0
      %483 = vmatprep.subr.bf16.mxu0 0
      %484 = vmatpush2.bf16.msra.mxu0 0
      %485 = vmatprep.subr.bf16.mxu0 0
      %486 = vmatpush2.bf16.msra.mxu0 0
      %487 = vmatprep.subr.bf16.mxu0 0
      %488 = vmatpush2.bf16.msra.mxu0 0
      %489 = vmatprep.mubr.bf16.mxu0 0
      %490 = vmatmul.mubr.bf16.gmra.mxu0 %v442
      %v491 = vpop.f32.mrf.mxu0
      %v492 = vadd.f32 0.0, %v491
      %v493 = vpop.f32.mrf.mxu0
      %v494 = vpop.f32.mrf.mxu0
      %v495 = vadd.f32 0.0, %v494
      %v496 = vpop.f32.mrf.mxu0
      %497 = vmatprep.mubr.bf16.mxu0 0
      %498 = vmatmul.mubr.bf16.gmra.mxu0 %v445
      %v499 = vpop.f32.mrf.mxu0
      %v500 = vadd.f32 0.0, %v499
      %v501 = vpop.f32.mrf.mxu0
      %v502 = vpop.f32.mrf.mxu0
      %v503 = vadd.f32 0.0, %v502
      %v504 = vpop.f32.mrf.mxu0
      %505 = vmatprep.mubr.bf16.mxu0 0
      %506 = vmatmul.mubr.bf16.gmra.mxu0 %v448
      %v507 = vpop.f32.mrf.mxu0
      %v508 = vadd.f32 0.0, %v507
      %v509 = vpop.f32.mrf.mxu0
      %v510 = vpop.f32.mrf.mxu0
      %v511 = vadd.f32 0.0, %v510
      %v512 = vpop.f32.mrf.mxu0
      %513 = vmatprep.mubr.bf16.mxu0 0
      %514 = vmatmul.mubr.bf16.gmra.mxu0 %v451
      %v515 = vpop.f32.mrf.mxu0
      %v516 = vadd.f32 0.0, %v515
      %v517 = vpop.f32.mrf.mxu0
      %v518 = vpop.f32.mrf.mxu0
      %v519 = vadd.f32 0.0, %v518
      %v520 = vpop.f32.mrf.mxu0
      %521 = vdwg.mxu0
      %v530 = vunpack.c.l.b16 %v314
      %v531 = vunpack.c.l.b16 %v315
      %v532 = vunpack.c.l.b16 %v316
      %v533 = vunpack.c.l.b16 %v317
      %v534 = vunpack.c.l.b16 %v318
      %v535 = vunpack.c.l.b16 %v319
      %v536 = vunpack.c.l.b16 %v320
      %v537 = vunpack.c.l.b16 %v321
      %v538 = vpack.c.b16 %v531, %v530
      %v539 = vpack.c.b16 %v533, %v532
      %v540 = vpack.c.b16 %v535, %v534
      %v541 = vpack.c.b16 %v537, %v536
      %v543 = vsel %vm440, %v538, 0
      %v546 = vsel %vm440, %v539, 0
      %v549 = vsel %vm440, %v540, 0
      %v552 = vsel %vm440, %v541, 0
      %v555 = vsel %vm453, %v322, 0
      %557 = vmatprep.subr.bf16.mxu0 0
      %558 = vmatpush1.bf16.msra.mxu0 0
      %559 = vmatprep.subr.bf16.mxu0 0
      %560 = vmatpush1.bf16.msra.mxu0 0
      %561 = vmatprep.subr.bf16.mxu0 0
      %562 = vmatpush1.bf16.msra.mxu0 0
      %563 = vmatprep.subr.bf16.mxu0 0
      %564 = vmatpush1.bf16.msra.mxu0 0
      %565 = vmatprep.subr.bf16.mxu0 0
      %566 = vmatpush1.bf16.msra.mxu0 0
      %567 = vmatprep.subr.bf16.mxu0 0
      %568 = vmatpush1.bf16.msra.mxu0 0
      %569 = vmatprep.subr.bf16.mxu0 0
      %570 = vmatpush1.bf16.msra.mxu0 0
      %571 = vmatprep.subr.bf16.mxu0 0
      %572 = vmatpush1.bf16.msra.mxu0 %v555
      %573 = vmatprep.subr.bf16.mxu0 0
      %574 = vmatpush2.bf16.msra.mxu0 0
      %575 = vmatprep.subr.bf16.mxu0 0
      %576 = vmatpush2.bf16.msra.mxu0 0
      %577 = vmatprep.subr.bf16.mxu0 0
      %578 = vmatpush2.bf16.msra.mxu0 0
      %579 = vmatprep.subr.bf16.mxu0 0
      %580 = vmatpush2.bf16.msra.mxu0 0
      %581 = vmatprep.subr.bf16.mxu0 0
      %582 = vmatpush2.bf16.msra.mxu0 0
      %583 = vmatprep.subr.bf16.mxu0 0
      %584 = vmatpush2.bf16.msra.mxu0 0
      %585 = vmatprep.subr.bf16.mxu0 0
      %586 = vmatpush2.bf16.msra.mxu0 0
      %587 = vmatprep.subr.bf16.mxu0 0
      %588 = vmatpush2.bf16.msra.mxu0 0
      %589 = vmatprep.mubr.bf16.mxu0 0
      %590 = vmatmul.mubr.bf16.gmra.mxu0 %v543
      %v591 = vpop.f32.mrf.mxu0
      %v592 = vadd.f32 %v492, %v591
      %v593 = vpop.f32.mrf.mxu0
      %v594 = vpop.f32.mrf.mxu0
      %v595 = vadd.f32 %v495, %v594
      %v596 = vpop.f32.mrf.mxu0
      %597 = vmatprep.mubr.bf16.mxu0 0
      %598 = vmatmul.mubr.bf16.gmra.mxu0 %v546
      %v599 = vpop.f32.mrf.mxu0
      %v600 = vadd.f32 %v500, %v599
      %v601 = vpop.f32.mrf.mxu0
      %v602 = vpop.f32.mrf.mxu0
      %v603 = vadd.f32 %v503, %v602
      %v604 = vpop.f32.mrf.mxu0
      %605 = vmatprep.mubr.bf16.mxu0 0
      %606 = vmatmul.mubr.bf16.gmra.mxu0 %v549
      %v607 = vpop.f32.mrf.mxu0
      %v608 = vadd.f32 %v508, %v607
      %v609 = vpop.f32.mrf.mxu0
      %v610 = vpop.f32.mrf.mxu0
      %v611 = vadd.f32 %v511, %v610
      %v612 = vpop.f32.mrf.mxu0
      %613 = vmatprep.mubr.bf16.mxu0 0
      %614 = vmatmul.mubr.bf16.gmra.mxu0 %v552
      %v615 = vpop.f32.mrf.mxu0
      %v616 = vadd.f32 %v516, %v615
      %v617 = vpop.f32.mrf.mxu0
      %v618 = vpop.f32.mrf.mxu0
      %v619 = vadd.f32 %v519, %v618
      %v620 = vpop.f32.mrf.mxu0
      %621 = vdwg.mxu0
      %v622 = vld [vmem:[#allocation2] sm:$0xe]
      %v623 = vld [vmem:[#allocation2 + $0xc] sm:$0xe]
      %v624 = vld [vmem:[#allocation2 + $0x18] sm:$0xe]
      %v625 = vld [vmem:[#allocation2 + $0x24] sm:$0xe]
      %vm634 = vcmask 1042432
      %vm635 = vcmask 1046532
      %vm636 = vmor %vm634, %vm635
      %v637 = vrot.slane %v622, 5
      %v638 = vrot.slane %v637, 4
      %v639 = vrot.slane %v315, 5
      %v640 = vsel %vm636, %v638, %v639
      %v641 = vrot.slane %v639, 4
      %v642 = vrot.slane %v323, 5
      %v643 = vsel %vm636, %v641, %v642
      %v644 = vrot.slane %v623, 5
      %v645 = vrot.slane %v644, 4
      %v646 = vrot.slane %v317, 5
      %v647 = vsel %vm636, %v645, %v646
      %v648 = vrot.slane %v646, 4
      %v649 = vrot.slane %v324, 5
      %v650 = vsel %vm636, %v648, %v649
      %v651 = vrot.slane %v624, 5
      %v652 = vrot.slane %v651, 4
      %v653 = vrot.slane %v319, 5
      %v654 = vsel %vm636, %v652, %v653
      %v655 = vrot.slane %v653, 4
      %v656 = vrot.slane %v325, 5
      %v657 = vsel %vm636, %v655, %v656
      %v658 = vrot.slane %v625, 5
      %v659 = vrot.slane %v658, 4
      %v660 = vrot.slane %v321, 5
      %v661 = vsel %vm636, %v659, %v660
      %v662 = vrot.slane %v660, 4
      %v663 = vrot.slane %v326, 5
      %v664 = vsel %vm636, %v662, %v663
      %s665 = scalar_lea.vmem %s1, 4
      %v666 = vld [vmem:[%s665] sm:$0x3]
      %v667 = vunpack.c.l.b16 %v640
      %v668 = vunpack.c.l.b16 %v643
      %v669 = vunpack.c.l.b16 %v647
      %v670 = vunpack.c.l.b16 %v650
      %v671 = vunpack.c.l.b16 %v654
      %v672 = vunpack.c.l.b16 %v657
      %v673 = vunpack.c.l.b16 %v661
      %v674 = vunpack.c.l.b16 %v664
      %v675 = vpack.c.b16 %v668, %v667
      %v676 = vpack.c.b16 %v670, %v669
      %v677 = vpack.c.b16 %v672, %v671
      %v678 = vpack.c.b16 %v674, %v673
      %v680 = vsel %vm440, %v675, 0
      %v683 = vsel %vm440, %v676, 0
      %v686 = vsel %vm440, %v677, 0
      %v689 = vsel %vm440, %v678, 0
      %v692 = vsel %vm453, %v666, 0
      %694 = vmatprep.subr.bf16.mxu0 0
      %695 = vmatpush1.bf16.msra.mxu0 0
      %696 = vmatprep.subr.bf16.mxu0 0
      %697 = vmatpush1.bf16.msra.mxu0 0
      %698 = vmatprep.subr.bf16.mxu0 0
      %699 = vmatpush1.bf16.msra.mxu0 0
      %700 = vmatprep.subr.bf16.mxu0 0
      %701 = vmatpush1.bf16.msra.mxu0 0
      %702 = vmatprep.subr.bf16.mxu0 0
      %703 = vmatpush1.bf16.msra.mxu0 0
      %704 = vmatprep.subr.bf16.mxu0 0
      %705 = vmatpush1.bf16.msra.mxu0 0
      %706 = vmatprep.subr.bf16.mxu0 0
      %707 = vmatpush1.bf16.msra.mxu0 0
      %708 = vmatprep.subr.bf16.mxu0 0
      %709 = vmatpush1.bf16.msra.mxu0 %v692
      %710 = vmatprep.subr.bf16.mxu0 0
      %711 = vmatpush2.bf16.msra.mxu0 0
      %712 = vmatprep.subr.bf16.mxu0 0
      %713 = vmatpush2.bf16.msra.mxu0 0
      %714 = vmatprep.subr.bf16.mxu0 0
      %715 = vmatpush2.bf16.msra.mxu0 0
      %716 = vmatprep.subr.bf16.mxu0 0
      %717 = vmatpush2.bf16.msra.mxu0 0
      %718 = vmatprep.subr.bf16.mxu0 0
      %719 = vmatpush2.bf16.msra.mxu0 0
      %720 = vmatprep.subr.bf16.mxu0 0
      %721 = vmatpush2.bf16.msra.mxu0 0
      %722 = vmatprep.subr.bf16.mxu0 0
      %723 = vmatpush2.bf16.msra.mxu0 0
      %724 = vmatprep.subr.bf16.mxu0 0
      %725 = vmatpush2.bf16.msra.mxu0 0
      %726 = vmatprep.mubr.bf16.mxu0 0
      %727 = vmatmul.mubr.bf16.gmra.mxu0 %v680
      %v728 = vpop.f32.mrf.mxu0
      %v729 = vadd.f32 0.0, %v728
      %v730 = vpop.f32.mrf.mxu0
      %v731 = vpop.f32.mrf.mxu0
      %v732 = vadd.f32 0.0, %v731
      %v733 = vpop.f32.mrf.mxu0
      %734 = vmatprep.mubr.bf16.mxu0 0
      %735 = vmatmul.mubr.bf16.gmra.mxu0 %v683
      %v736 = vpop.f32.mrf.mxu0
      %v737 = vadd.f32 0.0, %v736
      %v738 = vpop.f32.mrf.mxu0
      %v739 = vpop.f32.mrf.mxu0
      %v740 = vadd.f32 0.0, %v739
      %v741 = vpop.f32.mrf.mxu0
      %742 = vmatprep.mubr.bf16.mxu0 0
      %743 = vmatmul.mubr.bf16.gmra.mxu0 %v686
      %v744 = vpop.f32.mrf.mxu0
      %v745 = vadd.f32 0.0, %v744
      %v746 = vpop.f32.mrf.mxu0
      %v747 = vpop.f32.mrf.mxu0
      %v748 = vadd.f32 0.0, %v747
      %v749 = vpop.f32.mrf.mxu0
      %750 = vmatprep.mubr.bf16.mxu0 0
      %751 = vmatmul.mubr.bf16.gmra.mxu0 %v689
      %v752 = vpop.f32.mrf.mxu0
      %v753 = vadd.f32 0.0, %v752
      %v754 = vpop.f32.mrf.mxu0
      %v755 = vpop.f32.mrf.mxu0
      %v756 = vadd.f32 0.0, %v755
      %v757 = vpop.f32.mrf.mxu0
      %758 = vdwg.mxu0
      %v759 = vadd.f32 %v592, %v729
      %v760 = vadd.f32 %v595, %v732
      %v761 = vadd.f32 %v600, %v737
      %v762 = vadd.f32 %v603, %v740
      %v763 = vadd.f32 %v608, %v745
      %v764 = vadd.f32 %v611, %v748
      %v765 = vadd.f32 %v616, %v753
      %v766 = vadd.f32 %v619, %v756
      %v767 = vld [vmem:[%s2] sm:$0x1]
      %v769 = vlaneseq
      %v770 = vshrl.u32 %v769, 7
      %v771 = vsub.s32 0, %v770
      %v772 = vrot.slane %v767, %v771
      %v774 = vadd.f32 %v759, %v772
      %v775 = vadd.f32 %v760, %v772
      %v776 = vadd.f32 %v761, %v772
      %v777 = vadd.f32 %v762, %v772
      %v778 = vadd.f32 %v763, %v772
      %v779 = vadd.f32 %v764, %v772
      %v780 = vadd.f32 %v765, %v772
      %v781 = vadd.f32 %v766, %v772
      %v782 = vmax.f32 %v774, 0.0
      %v783 = vmax.f32 %v775, 0.0
      %v784 = vmax.f32 %v776, 0.0
      %v785 = vmax.f32 %v777, 0.0
      %v786 = vmax.f32 %v778, 0.0
      %v787 = vmax.f32 %v779, 0.0
      %v788 = vmax.f32 %v780, 0.0
      %v789 = vmax.f32 %v781, 0.0
      %v790 = vpack.c.bf16 %v783, %v782
      %v791 = vpack.c.bf16 %v785, %v784
      %v792 = vpack.c.bf16 %v787, %v786
      %v793 = vpack.c.bf16 %v789, %v788
      %v798 = vunpack.c.l.b16 %v790
      %v799 = vunpack.c.h.b16 %v790
      %v800 = vunpack.c.l.b16 %v791
      %v801 = vunpack.c.h.b16 %v791
      %v802 = vunpack.c.l.b16 %v792
      %v803 = vunpack.c.h.b16 %v792
      %v804 = vunpack.c.l.b16 %v793
      %v805 = vunpack.c.h.b16 %v793
      %v806 = vpack.c.b16 %v798, %v798
      %v807 = vpack.c.b16 %v799, %v799
      %v808 = vpack.c.b16 %v800, %v800
      %v809 = vpack.c.b16 %v801, %v801
      %v810 = vpack.c.b16 %v802, %v802
      %v811 = vpack.c.b16 %v803, %v803
      %v812 = vpack.c.b16 %v804, %v804
      %v813 = vpack.c.b16 %v805, %v805
      %vm814 = vcmask 1041408
      %vm815 = vcmask 1045508
      %vm816 = vmor %vm814, %vm815
      %v817 = vrot.slane %v806, 6
      %v818 = vrot.slane %v817, 4
      %v819 = vrot.slane %v807, 6
      %v820 = vsel %vm816, %v818, %v819
      %v821 = vrot.slane %v819, 4
      %v822 = vrot.slane %v808, 6
      %v823 = vrot.slane %v822, 4
      %v824 = vrot.slane %v809, 6
      %v825 = vsel %vm816, %v823, %v824
      %v826 = vrot.slane %v824, 4
      %v827 = vrot.slane %v810, 6
      %v828 = vrot.slane %v827, 4
      %v829 = vrot.slane %v811, 6
      %v830 = vsel %vm816, %v828, %v829
      %v831 = vrot.slane %v829, 4
      %v832 = vrot.slane %v812, 6
      %v833 = vrot.slane %v832, 4
      %v834 = vrot.slane %v813, 6
      %v835 = vsel %vm816, %v833, %v834
      %v836 = vrot.slane %v834, 4
      %vm849 = vcmask 60418
      %850 = vst.msk [vmem:[#allocation3] sm:$0xc] %vm849, %v817
      %vm851 = vcmask 60416
      %852 = vst.msk [vmem:[#allocation3 + $0x4] sm:$0xf] %vm851, %v820
      %vm853 = vcmask 58368
      %854 = vst.msk [vmem:[#allocation3 + $0x8] sm:$0x3] %vm853, %v821
      %855 = vst.msk [vmem:[#allocation3 + $0xc] sm:$0xc] %vm849, %v822
      %856 = vst.msk [vmem:[#allocation3 + $0x10] sm:$0xf] %vm851, %v825
      %857 = vst.msk [vmem:[#allocation3 + $0x14] sm:$0x3] %vm853, %v826
      %858 = vst.msk [vmem:[#allocation3 + $0x18] sm:$0xc] %vm849, %v827
      %859 = vst.msk [vmem:[#allocation3 + $0x1c] sm:$0xf] %vm851, %v830
      %860 = vst.msk [vmem:[#allocation3 + $0x20] sm:$0x3] %vm853, %v831
      %861 = vst.msk [vmem:[#allocation3 + $0x24] sm:$0xc] %vm849, %v832
      %862 = vst.msk [vmem:[#allocation3 + $0x28] sm:$0xf] %vm851, %v835
      %863 = vst.msk [vmem:[#allocation3 + $0x2c] sm:$0x3] %vm853, %v836
      %v864 = vld [vmem:[#allocation3] sm:$0xf]
      %v865 = vld [vmem:[#allocation3 + $0x4] sm:$0xf]
      %v866 = vld [vmem:[#allocation3 + $0xc] sm:$0xf]
      %v867 = vld [vmem:[#allocation3 + $0x10] sm:$0xf]
      %v868 = vld [vmem:[#allocation3 + $0x18] sm:$0xf]
      %v869 = vld [vmem:[#allocation3 + $0x1c] sm:$0xf]
      %v870 = vld [vmem:[#allocation3 + $0x24] sm:$0xf]
      %v871 = vld [vmem:[#allocation3 + $0x28] sm:$0xf]
      %v872 = vld [vmem:[%s3] sm:$0xf]
      %v873 = vld [vmem:[#allocation3] sm:$0xe]
      %v874 = vld [vmem:[#allocation3 + $0x8] sm:$0x1]
      %v875 = vld [vmem:[#allocation3 + $0xc] sm:$0xe]
      %v876 = vld [vmem:[#allocation3 + $0x14] sm:$0x1]
      %v877 = vld [vmem:[#allocation3 + $0x18] sm:$0xe]
      %v878 = vld [vmem:[#allocation3 + $0x20] sm:$0x1]
      %v879 = vld [vmem:[#allocation3 + $0x24] sm:$0xe]
      %v880 = vld [vmem:[#allocation3 + $0x2c] sm:$0x1]
      %v893 = vrot.slane %v873, 5
      %v894 = vrot.slane %v893, 4
      %v895 = vrot.slane %v865, 5
      %v896 = vsel %vm636, %v894, %v895
      %v897 = vrot.slane %v895, 4
      %v898 = vrot.slane %v874, 5
      %v899 = vsel %vm636, %v897, %v898
      %v900 = vrot.slane %v875, 5
      %v901 = vrot.slane %v900, 4
      %v902 = vrot.slane %v867, 5
      %v903 = vsel %vm636, %v901, %v902
      %v904 = vrot.slane %v902, 4
      %v905 = vrot.slane %v876, 5
      %v906 = vsel %vm636, %v904, %v905
      %v907 = vrot.slane %v877, 5
      %v908 = vrot.slane %v907, 4
      %v909 = vrot.slane %v869, 5
      %v910 = vsel %vm636, %v908, %v909
      %v911 = vrot.slane %v909, 4
      %v912 = vrot.slane %v878, 5
      %v913 = vsel %vm636, %v911, %v912
      %v914 = vrot.slane %v879, 5
      %v915 = vrot.slane %v914, 4
      %v916 = vrot.slane %v871, 5
      %v917 = vsel %vm636, %v915, %v916
      %v918 = vrot.slane %v916, 4
      %v919 = vrot.slane %v880, 5
      %v920 = vsel %vm636, %v918, %v919
      %s921 = scalar_lea.vmem %s3, 4
      %v922 = vld [vmem:[%s921] sm:$0xf]
      %v923 = vunpack.c.l.b16 %v896
      %v924 = vunpack.c.l.b16 %v899
      %v925 = vunpack.c.l.b16 %v903
      %v926 = vunpack.c.l.b16 %v906
      %v927 = vunpack.c.l.b16 %v910
      %v928 = vunpack.c.l.b16 %v913
      %v929 = vunpack.c.l.b16 %v917
      %v930 = vunpack.c.l.b16 %v920
      %v931 = vpack.c.b16 %v924, %v923
      %v932 = vpack.c.b16 %v926, %v925
      %v933 = vpack.c.b16 %v928, %v927
      %v934 = vpack.c.b16 %v930, %v929
      %vm935 = vcmask 64512
      %v937 = vsel %vm935, %v931, 0
      %v940 = vsel %vm935, %v932, 0
      %v943 = vsel %vm935, %v933, 0
      %v946 = vsel %vm935, %v934, 0
      %vm948 = vcmask 1043456
      %v950 = vsel %vm948, %v922, 0
      %952 = vmatprep.subr.bf16.mxu0 0
      %953 = vmatpush1.bf16.msra.mxu0 0
      %954 = vmatprep.subr.bf16.mxu0 0
      %955 = vmatpush1.bf16.msra.mxu0 0
      %956 = vmatprep.subr.bf16.mxu0 0
      %957 = vmatpush1.bf16.msra.mxu0 0
      %958 = vmatprep.subr.bf16.mxu0 0
      %959 = vmatpush1.bf16.msra.mxu0 0
      %960 = vmatprep.subr.bf16.mxu0 0
      %961 = vmatpush1.bf16.msra.mxu0 0
      %962 = vmatprep.subr.bf16.mxu0 0
      %963 = vmatpush1.bf16.msra.mxu0 0
      %964 = vmatprep.subr.bf16.mxu0 0
      %965 = vmatpush1.bf16.msra.mxu0 0
      %966 = vmatprep.subr.bf16.mxu0 0
      %967 = vmatpush1.bf16.msra.mxu0 %v950
      %968 = vmatprep.subr.bf16.mxu0 0
      %969 = vmatpush2.bf16.msra.mxu0 0
      %970 = vmatprep.subr.bf16.mxu0 0
      %971 = vmatpush2.bf16.msra.mxu0 0
      %972 = vmatprep.subr.bf16.mxu0 0
      %973 = vmatpush2.bf16.msra.mxu0 0
      %974 = vmatprep.subr.bf16.mxu0 0
      %975 = vmatpush2.bf16.msra.mxu0 0
      %976 = vmatprep.subr.bf16.mxu0 0
      %977 = vmatpush2.bf16.msra.mxu0 0
      %978 = vmatprep.subr.bf16.mxu0 0
      %979 = vmatpush2.bf16.msra.mxu0 0
      %980 = vmatprep.subr.bf16.mxu0 0
      %981 = vmatpush2.bf16.msra.mxu0 0
      %982 = vmatprep.subr.bf16.mxu0 0
      %983 = vmatpush2.bf16.msra.mxu0 0
      %984 = vmatprep.mubr.bf16.mxu0 0
      %985 = vmatmul.mubr.bf16.gmra.mxu0 %v937
      %v986 = vpop.f32.mrf.mxu0
      %v987 = vadd.f32 0.0, %v986
      %v988 = vpop.f32.mrf.mxu0
      %v989 = vpop.f32.mrf.mxu0
      %v990 = vadd.f32 0.0, %v989
      %v991 = vpop.f32.mrf.mxu0
      %992 = vmatprep.mubr.bf16.mxu0 0
      %993 = vmatmul.mubr.bf16.gmra.mxu0 %v940
      %v994 = vpop.f32.mrf.mxu0
      %v995 = vadd.f32 0.0, %v994
      %v996 = vpop.f32.mrf.mxu0
      %v997 = vpop.f32.mrf.mxu0
      %v998 = vadd.f32 0.0, %v997
      %v999 = vpop.f32.mrf.mxu0
      %1000 = vmatprep.mubr.bf16.mxu0 0
      %1001 = vmatmul.mubr.bf16.gmra.mxu0 %v943
      %v1002 = vpop.f32.mrf.mxu0
      %v1003 = vadd.f32 0.0, %v1002
      %v1004 = vpop.f32.mrf.mxu0
      %v1005 = vpop.f32.mrf.mxu0
      %v1006 = vadd.f32 0.0, %v1005
      %v1007 = vpop.f32.mrf.mxu0
      %1008 = vmatprep.mubr.bf16.mxu0 0
      %1009 = vmatmul.mubr.bf16.gmra.mxu0 %v946
      %v1010 = vpop.f32.mrf.mxu0
      %v1011 = vadd.f32 0.0, %v1010
      %v1012 = vpop.f32.mrf.mxu0
      %v1013 = vpop.f32.mrf.mxu0
      %v1014 = vadd.f32 0.0, %v1013
      %v1015 = vpop.f32.mrf.mxu0
      %1016 = vdwg.mxu0
      %v1021 = vunpack.c.l.b16 %v864
      %v1022 = vunpack.c.l.b16 %v865
      %v1023 = vunpack.c.l.b16 %v866
      %v1024 = vunpack.c.l.b16 %v867
      %v1025 = vunpack.c.l.b16 %v868
      %v1026 = vunpack.c.l.b16 %v869
      %v1027 = vunpack.c.l.b16 %v870
      %v1028 = vunpack.c.l.b16 %v871
      %v1029 = vpack.c.b16 %v1022, %v1021
      %v1030 = vpack.c.b16 %v1024, %v1023
      %v1031 = vpack.c.b16 %v1026, %v1025
      %v1032 = vpack.c.b16 %v1028, %v1027
      %v1034 = vsel %vm935, %v1029, 0
      %v1037 = vsel %vm935, %v1030, 0
      %v1040 = vsel %vm935, %v1031, 0
      %v1043 = vsel %vm935, %v1032, 0
      %v1046 = vsel %vm948, %v872, 0
      %1048 = vmatprep.subr.bf16.mxu0 0
      %1049 = vmatpush1.bf16.msra.mxu0 0
      %1050 = vmatprep.subr.bf16.mxu0 0
      %1051 = vmatpush1.bf16.msra.mxu0 0
      %1052 = vmatprep.subr.bf16.mxu0 0
      %1053 = vmatpush1.bf16.msra.mxu0 0
      %1054 = vmatprep.subr.bf16.mxu0 0
      %1055 = vmatpush1.bf16.msra.mxu0 0
      %1056 = vmatprep.subr.bf16.mxu0 0
      %1057 = vmatpush1.bf16.msra.mxu0 0
      %1058 = vmatprep.subr.bf16.mxu0 0
      %1059 = vmatpush1.bf16.msra.mxu0 0
      %1060 = vmatprep.subr.bf16.mxu0 0
      %1061 = vmatpush1.bf16.msra.mxu0 0
      %1062 = vmatprep.subr.bf16.mxu0 0
      %1063 = vmatpush1.bf16.msra.mxu0 %v1046
      %1064 = vmatprep.subr.bf16.mxu0 0
      %1065 = vmatpush2.bf16.msra.mxu0 0
      %1066 = vmatprep.subr.bf16.mxu0 0
      %1067 = vmatpush2.bf16.msra.mxu0 0
      %1068 = vmatprep.subr.bf16.mxu0 0
      %1069 = vmatpush2.bf16.msra.mxu0 0
      %1070 = vmatprep.subr.bf16.mxu0 0
      %1071 = vmatpush2.bf16.msra.mxu0 0
      %1072 = vmatprep.subr.bf16.mxu0 0
      %1073 = vmatpush2.bf16.msra.mxu0 0
      %1074 = vmatprep.subr.bf16.mxu0 0
      %1075 = vmatpush2.bf16.msra.mxu0 0
      %1076 = vmatprep.subr.bf16.mxu0 0
      %1077 = vmatpush2.bf16.msra.mxu0 0
      %1078 = vmatprep.subr.bf16.mxu0 0
      %1079 = vmatpush2.bf16.msra.mxu0 0
      %1080 = vmatprep.mubr.bf16.mxu0 0
      %1081 = vmatmul.mubr.bf16.gmra.mxu0 %v1034
      %v1082 = vpop.f32.mrf.mxu0
      %v1083 = vadd.f32 %v987, %v1082
      %v1084 = vpop.f32.mrf.mxu0
      %v1085 = vpop.f32.mrf.mxu0
      %v1086 = vadd.f32 %v990, %v1085
      %v1087 = vpop.f32.mrf.mxu0
      %1088 = vmatprep.mubr.bf16.mxu0 0
      %1089 = vmatmul.mubr.bf16.gmra.mxu0 %v1037
      %v1090 = vpop.f32.mrf.mxu0
      %v1091 = vadd.f32 %v995, %v1090
      %v1092 = vpop.f32.mrf.mxu0
      %v1093 = vpop.f32.mrf.mxu0
      %v1094 = vadd.f32 %v998, %v1093
      %v1095 = vpop.f32.mrf.mxu0
      %1096 = vmatprep.mubr.bf16.mxu0 0
      %1097 = vmatmul.mubr.bf16.gmra.mxu0 %v1040
      %v1098 = vpop.f32.mrf.mxu0
      %v1099 = vadd.f32 %v1003, %v1098
      %v1100 = vpop.f32.mrf.mxu0
      %v1101 = vpop.f32.mrf.mxu0
      %v1102 = vadd.f32 %v1006, %v1101
      %v1103 = vpop.f32.mrf.mxu0
      %1104 = vmatprep.mubr.bf16.mxu0 0
      %1105 = vmatmul.mubr.bf16.gmra.mxu0 %v1043
      %v1106 = vpop.f32.mrf.mxu0
      %v1107 = vadd.f32 %v1011, %v1106
      %v1108 = vpop.f32.mrf.mxu0
      %v1109 = vpop.f32.mrf.mxu0
      %v1110 = vadd.f32 %v1014, %v1109
      %v1111 = vpop.f32.mrf.mxu0
      %1112 = vdwg.mxu0
      %v1113 = vld [vmem:[#allocation3] sm:$0xc]
      %v1114 = vld [vmem:[#allocation3 + $0x8] sm:$0x3]
      %v1115 = vld [vmem:[#allocation3 + $0xc] sm:$0xc]
      %v1116 = vld [vmem:[#allocation3 + $0x14] sm:$0x3]
      %v1117 = vld [vmem:[#allocation3 + $0x18] sm:$0xc]
      %v1118 = vld [vmem:[#allocation3 + $0x20] sm:$0x3]
      %v1119 = vld [vmem:[#allocation3 + $0x24] sm:$0xc]
      %v1120 = vld [vmem:[#allocation3 + $0x2c] sm:$0x3]
      %v1129 = vrot.slane %v1113, 6
      %v1130 = vrot.slane %v1129, 4
      %v1131 = vrot.slane %v865, 6
      %v1132 = vsel %vm816, %v1130, %v1131
      %v1133 = vrot.slane %v1131, 4
      %v1134 = vrot.slane %v1114, 6
      %v1135 = vsel %vm816, %v1133, %v1134
      %v1136 = vrot.slane %v1115, 6
      %v1137 = vrot.slane %v1136, 4
      %v1138 = vrot.slane %v867, 6
      %v1139 = vsel %vm816, %v1137, %v1138
      %v1140 = vrot.slane %v1138, 4
      %v1141 = vrot.slane %v1116, 6
      %v1142 = vsel %vm816, %v1140, %v1141
      %v1143 = vrot.slane %v1117, 6
      %v1144 = vrot.slane %v1143, 4
      %v1145 = vrot.slane %v869, 6
      %v1146 = vsel %vm816, %v1144, %v1145
      %v1147 = vrot.slane %v1145, 4
      %v1148 = vrot.slane %v1118, 6
      %v1149 = vsel %vm816, %v1147, %v1148
      %v1150 = vrot.slane %v1119, 6
      %v1151 = vrot.slane %v1150, 4
      %v1152 = vrot.slane %v871, 6
      %v1153 = vsel %vm816, %v1151, %v1152
      %v1154 = vrot.slane %v1152, 4
      %v1155 = vrot.slane %v1120, 6
      %v1156 = vsel %vm816, %v1154, %v1155
      %s1157 = scalar_lea.vmem %s3, 8
      %v1158 = vld [vmem:[%s1157] sm:$0xf]
      %v1159 = vunpack.c.l.b16 %v1132
      %v1160 = vunpack.c.l.b16 %v1135
      %v1161 = vunpack.c.l.b16 %v1139
      %v1162 = vunpack.c.l.b16 %v1142
      %v1163 = vunpack.c.l.b16 %v1146
      %v1164 = vunpack.c.l.b16 %v1149
      %v1165 = vunpack.c.l.b16 %v1153
      %v1166 = vunpack.c.l.b16 %v1156
      %v1167 = vpack.c.b16 %v1160, %v1159
      %v1168 = vpack.c.b16 %v1162, %v1161
      %v1169 = vpack.c.b16 %v1164, %v1163
      %v1170 = vpack.c.b16 %v1166, %v1165
      %v1172 = vsel %vm935, %v1167, 0
      %v1175 = vsel %vm935, %v1168, 0
      %v1178 = vsel %vm935, %v1169, 0
      %v1181 = vsel %vm935, %v1170, 0
      %v1184 = vsel %vm948, %v1158, 0
      %1186 = vmatprep.subr.bf16.mxu0 0
      %1187 = vmatpush1.bf16.msra.mxu0 0
      %1188 = vmatprep.subr.bf16.mxu0 0
      %1189 = vmatpush1.bf16.msra.mxu0 0
      %1190 = vmatprep.subr.bf16.mxu0 0
      %1191 = vmatpush1.bf16.msra.mxu0 0
      %1192 = vmatprep.subr.bf16.mxu0 0
      %1193 = vmatpush1.bf16.msra.mxu0 0
      %1194 = vmatprep.subr.bf16.mxu0 0
      %1195 = vmatpush1.bf16.msra.mxu0 0
      %1196 = vmatprep.subr.bf16.mxu0 0
      %1197 = vmatpush1.bf16.msra.mxu0 0
      %1198 = vmatprep.subr.bf16.mxu0 0
      %1199 = vmatpush1.bf16.msra.mxu0 0
      %1200 = vmatprep.subr.bf16.mxu0 0
      %1201 = vmatpush1.bf16.msra.mxu0 %v1184
      %1202 = vmatprep.subr.bf16.mxu0 0
      %1203 = vmatpush2.bf16.msra.mxu0 0
      %1204 = vmatprep.subr.bf16.mxu0 0
      %1205 = vmatpush2.bf16.msra.mxu0 0
      %1206 = vmatprep.subr.bf16.mxu0 0
      %1207 = vmatpush2.bf16.msra.mxu0 0
      %1208 = vmatprep.subr.bf16.mxu0 0
      %1209 = vmatpush2.bf16.msra.mxu0 0
      %1210 = vmatprep.subr.bf16.mxu0 0
      %1211 = vmatpush2.bf16.msra.mxu0 0
      %1212 = vmatprep.subr.bf16.mxu0 0
      %1213 = vmatpush2.bf16.msra.mxu0 0
      %1214 = vmatprep.subr.bf16.mxu0 0
      %1215 = vmatpush2.bf16.msra.mxu0 0
      %1216 = vmatprep.subr.bf16.mxu0 0
      %1217 = vmatpush2.bf16.msra.mxu0 0
      %1218 = vmatprep.mubr.bf16.mxu0 0
      %1219 = vmatmul.mubr.bf16.gmra.mxu0 %v1172
      %v1220 = vpop.f32.mrf.mxu0
      %v1221 = vadd.f32 0.0, %v1220
      %v1222 = vpop.f32.mrf.mxu0
      %v1223 = vpop.f32.mrf.mxu0
      %v1224 = vadd.f32 0.0, %v1223
      %v1225 = vpop.f32.mrf.mxu0
      %1226 = vmatprep.mubr.bf16.mxu0 0
      %1227 = vmatmul.mubr.bf16.gmra.mxu0 %v1175
      %v1228 = vpop.f32.mrf.mxu0
      %v1229 = vadd.f32 0.0, %v1228
      %v1230 = vpop.f32.mrf.mxu0
      %v1231 = vpop.f32.mrf.mxu0
      %v1232 = vadd.f32 0.0, %v1231
      %v1233 = vpop.f32.mrf.mxu0
      %1234 = vmatprep.mubr.bf16.mxu0 0
      %1235 = vmatmul.mubr.bf16.gmra.mxu0 %v1178
      %v1236 = vpop.f32.mrf.mxu0
      %v1237 = vadd.f32 0.0, %v1236
      %v1238 = vpop.f32.mrf.mxu0
      %v1239 = vpop.f32.mrf.mxu0
      %v1240 = vadd.f32 0.0, %v1239
      %v1241 = vpop.f32.mrf.mxu0
      %1242 = vmatprep.mubr.bf16.mxu0 0
      %1243 = vmatmul.mubr.bf16.gmra.mxu0 %v1181
      %v1244 = vpop.f32.mrf.mxu0
      %v1245 = vadd.f32 0.0, %v1244
      %v1246 = vpop.f32.mrf.mxu0
      %v1247 = vpop.f32.mrf.mxu0
      %v1248 = vadd.f32 0.0, %v1247
      %v1249 = vpop.f32.mrf.mxu0
      %1250 = vdwg.mxu0
      %v1251 = vadd.f32 %v1083, %v1221
      %v1252 = vadd.f32 %v1086, %v1224
      %v1253 = vadd.f32 %v1091, %v1229
      %v1254 = vadd.f32 %v1094, %v1232
      %v1255 = vadd.f32 %v1099, %v1237
      %v1256 = vadd.f32 %v1102, %v1240
      %v1257 = vadd.f32 %v1107, %v1245
      %v1258 = vadd.f32 %v1110, %v1248
      %v1259 = vld [vmem:[%s4] sm:$0x1]
      %v1261 = vlaneseq
      %v1262 = vshrl.u32 %v1261, 7
      %v1263 = vsub.s32 0, %v1262
      %v1264 = vrot.slane %v1259, %v1263
      %v1266 = vadd.f32 %v1251, %v1264
      %v1267 = vadd.f32 %v1252, %v1264
      %v1268 = vadd.f32 %v1253, %v1264
      %v1269 = vadd.f32 %v1254, %v1264
      %v1270 = vadd.f32 %v1255, %v1264
      %v1271 = vadd.f32 %v1256, %v1264
      %v1272 = vadd.f32 %v1257, %v1264
      %v1273 = vadd.f32 %v1258, %v1264
      %v1274 = vmax.f32 %v1266, 0.0
      %v1275 = vmax.f32 %v1267, 0.0
      %v1276 = vmax.f32 %v1268, 0.0
      %v1277 = vmax.f32 %v1269, 0.0
      %v1278 = vmax.f32 %v1270, 0.0
      %v1279 = vmax.f32 %v1271, 0.0
      %v1280 = vmax.f32 %v1272, 0.0
      %v1281 = vmax.f32 %v1273, 0.0
      %1282 = vst.msk [vmem:[%s231] sm:$0xff] %vm935, %v1274
      %1283 = vst.msk [vmem:[%s231 + $0x8] sm:$0xff] %vm935, %v1275
      %1284 = vst.msk [vmem:[%s231 + $0x10] sm:$0xff] %vm935, %v1276
      %1285 = vst.msk [vmem:[%s231 + $0x18] sm:$0xff] %vm935, %v1277
      %1286 = vst.msk [vmem:[%s231 + $0x20] sm:$0xff] %vm935, %v1278
      %1287 = vst.msk [vmem:[%s231 + $0x28] sm:$0xff] %vm935, %v1279
      %1288 = vst.msk [vmem:[%s231 + $0x30] sm:$0xff] %vm935, %v1280
      %1289 = vst.msk [vmem:[%s231 + $0x38] sm:$0xff] %vm935, %v1281
      %s1290 = smul.u32 4, %s16
      %p1291 = scmp.lt.s32.totalorder %s1290, 7
      %s1292 = scalar_select %p1291, %s1290, 7
      %s1293 = smul.addr %s1292, 2
      %s1294 = smul.addr %s1293, 8
      %s1295 = scalar_lea.vmem %s5, %s1294
      // Predicated region
      $region45: #{tpu_custom_call.1} parent=39 // pred_check
        %p1296 = pneg %p144
      $region46: #{tpu_custom_call.1} parent=39 // pred_check_branch
        %1298 = sbr.rel (%p1296) target = $region48
      $region47: #{tpu_custom_call.1} parent=39 // pred_region
        %s1299 = smul.u32 4, %s16
      $region48: #{tpu_custom_call.1} parent=39 // pred_fallthru
        _
    $region40: #{tpu_custom_call.1} parent=5 // pred_fallthru
      _
    %p1300 = scmp.le.s32.totalorder 2, %s11
    // Predicated region
    $region49: #{tpu_custom_call.1} parent=5 // pred_check
      %p1301 = pneg %p1300
    $region50: #{tpu_custom_call.1} parent=5 // pred_check_branch
      %1303 = sbr.rel (%p1301) target = $region52
    $region51: #{tpu_custom_call.1} parent=5 // pred_region
      %s1304 = ssub.s32 %s11, 2
      // Predicated region
      $region53: #{tpu_custom_call.1} parent=51 // pred_check
        %p1305 = pneg %p150
      $region54: #{tpu_custom_call.1} parent=51 // pred_check_branch
        %1307 = sbr.rel (%p1305) target = $region56
      $region55: #{tpu_custom_call.1} parent=51 // pred_region
        %s1308 = smul.u32 4, %s17
        %p1309 = scmp.lt.s32.totalorder %s1308, 7
        %s1310 = scalar_select %p1309, %s1308, 7
        %s1311 = smul.addr %s1310, 2
        %s1312 = smul.addr %s1311, 8
        %s1313 = scalar_lea.vmem %s5, %s1312
      $region56: #{tpu_custom_call.1} parent=51 // pred_fallthru
        _
    $region52: #{tpu_custom_call.1} parent=5 // pred_fallthru
      _
  $region6: #{tpu_custom_call.1} parent=0 // loop_footer
    %s15 = sadd.s32 1, %s11
  $region7: #{tpu_custom_call.1} parent=0 // loop_footer_branch
    %10 = sbr.rel target = $region3
  $region8: #{tpu_custom_call.1} parent=0 // loop_exit
    _

</llo_original>
